<compile_context>
chip_gen: v6e
topology: v6e:2x2x1
jax: 0.10.0
libtpu: 0.0.40
codegen_flags: <defaults>
</compile_context>

<pallas_src>
import functools

import jax
import jax.numpy as jnp
from jax import lax
from jax.experimental import pallas as pl
from jax.experimental.pallas import tpu as pltpu

BN_EPS = 1e-5
LANE = 128
SUBLANE = 8
# Contract the last dim of both operands: a[B,K] . w[N,K] -> [B,N].
_NT_DIMS = (((1,), (1,)), ((), ()))
# Comfortably inside every generation's VMEM (v5e scoped default is 16 MiB,
# v7x physical is 64 MiB); tile sizes below are budgeted against this.
_VMEM_LIMIT_BYTES = 32 * 1024 * 1024


def _round_up(n, m):
    return ((n + m - 1) // m) * m


def _stats_kernel(x_ref, w1_ref, gamma_ref, beta_ref, ss_ref, s1_ref, s2_ref,
                  *, inv_b):
    """Pass 1: accumulate fc1(x) column statistics; finalize BN scale/shift."""
    i = pl.program_id(0)

    @pl.when(i == 0)
    def _():
        s1_ref[...] = jnp.zeros_like(s1_ref)
        s2_ref[...] = jnp.zeros_like(s2_ref)

    # fc1 on the bf16 MXU path with f32 accumulation.  fc1 bias is folded out
    # (exactly cancelled by the training-mode batch-mean subtraction).
    h = lax.dot_general(x_ref[...].astype(jnp.bfloat16), w1_ref[...],
                        _NT_DIMS, preferred_element_type=jnp.float32)
    s1_ref[...] += jnp.sum(h, axis=0, keepdims=True)
    s2_ref[...] += jnp.sum(h * h, axis=0, keepdims=True)

    @pl.when(i == pl.num_programs(0) - 1)
    def _():
        mean = s1_ref[...] * inv_b
        var = s2_ref[...] * inv_b - mean * mean
        scale = gamma_ref[...] * lax.rsqrt(var + BN_EPS)
        shift = beta_ref[...] - mean * scale
        ss_ref[0:1, :] = scale
        ss_ref[1:2, :] = shift


def _apply_kernel(x_ref, w1_ref, w2_ref, b2_ref, ss_ref, o_ref):
    """Pass 2: recompute fc1, fused BN affine + relu, fc2 + residual + relu."""
    x = x_ref[...]
    h = lax.dot_general(x.astype(jnp.bfloat16), w1_ref[...],
                        _NT_DIMS, preferred_element_type=jnp.float32)
    h = jnp.maximum(h * ss_ref[0:1, :] + ss_ref[1:2, :], 0.0)
    out = lax.dot_general(h.astype(jnp.bfloat16), w2_ref[...],
                          _NT_DIMS, preferred_element_type=jnp.float32)
    out = out + b2_ref[...] + x
    o_ref[...] = jnp.maximum(out, 0.0).astype(o_ref.dtype)


def prepare_params(w1, b1, w2, b2, gamma, beta):
    """One-time parameter prep (hoisted out of the per-step forward): pad the
    downscale dim to a 128-lane multiple and cast weights to bf16."""
    del b1  # exactly cancelled by the training-mode BN mean subtraction
    D, F = w1.shape
    Dp = _round_up(D, LANE)
    gamma = gamma.reshape(1, D)
    beta = beta.reshape(1, D)
    if Dp != D:
        pad = Dp - D
        # Padded columns stay exactly zero end-to-end (zero w1 rows -> h = 0,
        # zero w2 columns -> no contribution), so no masking is needed.
        w1 = jnp.pad(w1, ((0, pad), (0, 0)))
        w2 = jnp.pad(w2, ((0, 0), (0, pad)))
        gamma = jnp.pad(gamma, ((0, 0), (0, pad)), constant_values=1.0)
        beta = jnp.pad(beta, ((0, 0), (0, pad)))
    return dict(
        w1=w1.astype(jnp.bfloat16),                 # [Dp, F]
        w2=w2.astype(jnp.bfloat16),                 # [F, Dp]
        b2=b2.reshape(1, -1).astype(jnp.float32),   # [1, F]
        gamma=gamma.astype(jnp.float32),            # [1, Dp]
        beta=beta.astype(jnp.float32),              # [1, Dp]
    )


def reslayer_forward(x, params, *, tile_b=256):
    """reslayer forward (training-mode BN). x: [B, F] f32."""
    B, F = x.shape
    w1, w2 = params["w1"], params["w2"]
    b2, gamma, beta = params["b2"], params["gamma"], params["beta"]
    Dp = w1.shape[0]

    # Batch tile: 256-aligned for the v6e/v7x MXU at production B, shrinks to
    # a sublane multiple for tiny batches.  Pad B with zero rows (exact for
    # the statistics, see module docstring) and slice them off at the end.
    TB = min(tile_b, _round_up(B, SUBLANE))
    Bp = _round_up(B, TB)
    x_p = jnp.pad(x, ((0, Bp - B), (0, 0))) if Bp != B else x
    grid = (Bp // TB,)

    const2 = lambda i: (0, 0)   # weights / params stay resident in VMEM

    # ---- Pass 1: batch statistics -> fused BN (scale, shift) ---------------
    scale_shift = pl.pallas_call(
        functools.partial(_stats_kernel, inv_b=1.0 / B),
        out_shape=jax.ShapeDtypeStruct((2, Dp), jnp.float32),
        grid_spec=pltpu.PrefetchScalarGridSpec(
            num_scalar_prefetch=0,
            grid=grid,
            in_specs=[
                pl.BlockSpec((TB, F), lambda i: (i, 0)),   # x tile (pipelined)
                pl.BlockSpec((Dp, F), const2),             # w1 (resident, bf16)
                pl.BlockSpec((1, Dp), const2),             # gamma
                pl.BlockSpec((1, Dp), const2),             # beta
            ],
            out_specs=pl.BlockSpec((2, Dp), const2),       # resident result
            scratch_shapes=[pltpu.VMEM((1, Dp), jnp.float32),
                            pltpu.VMEM((1, Dp), jnp.float32)],
        ),
        compiler_params=pltpu.CompilerParams(
            dimension_semantics=("arbitrary",),
            vmem_limit_bytes=_VMEM_LIMIT_BYTES),
    )(x_p, w1, gamma, beta)

    # ---- Pass 2: normalize + relu + fc2 + residual + relu ------------------
    out = pl.pallas_call(
        _apply_kernel,
        out_shape=jax.ShapeDtypeStruct((Bp, F), jnp.float32),
        grid_spec=pltpu.PrefetchScalarGridSpec(
            num_scalar_prefetch=0,
            grid=grid,
            in_specs=[
                pl.BlockSpec((TB, F), lambda i: (i, 0)),   # x tile (pipelined)
                pl.BlockSpec((Dp, F), const2),             # w1 (resident, bf16)
                pl.BlockSpec((F, Dp), const2),             # w2 (resident, bf16)
                pl.BlockSpec((1, F), const2),              # b2
                pl.BlockSpec((2, Dp), const2),             # fused scale/shift
            ],
            out_specs=pl.BlockSpec((TB, F), lambda i: (i, 0)),
        ),
        compiler_params=pltpu.CompilerParams(
            dimension_semantics=("parallel",),             # 2 TCs on v7x
            vmem_limit_bytes=_VMEM_LIMIT_BYTES),
    )(x_p, w1, w2, b2, scale_shift)

    return out[:B] if Bp != B else out


def reslayer_reference(x, w1, b1, w2, b2, gamma, beta):
    """Pure-JAX f32 reference (training-mode BatchNorm1d, biased variance)."""
    h = x @ w1.T + b1
    mean = jnp.mean(h, axis=0, keepdims=True)
    var = jnp.mean((h - mean) ** 2, axis=0, keepdims=True)
    h = (h - mean) / jnp.sqrt(var + BN_EPS) * gamma + beta
    h = jnp.maximum(h, 0.0)
    out = h @ w2.T + b2 + x
    return jnp.maximum(out, 0.0)


if __name__ == "__main__":
    B = 512          # batch: two 256-row tiles -> exercises the batch grid
    F = 128          # feature_dim == output_dim
    D = 64           # downscale_dim (padded to 128 inside prepare_params)

    key = jax.random.PRNGKey(0)
    kx, kw1, kb1, kw2, kb2, kg, kbt = jax.random.split(key, 7)

    x = jax.random.normal(kx, (B, F), dtype=jnp.float32)

    # Module init is N(0, 0.02) weights / zero biases / gamma=1 / beta=0, but
    # use non-trivial b1/gamma/beta here to stress the b1-cancellation and the
    # fused one-pass BN statistics (per review's correctness concerns).
    w1 = 0.02 * jax.random.normal(kw1, (D, F), dtype=jnp.float32)
    b1 = 0.1 * jax.random.normal(kb1, (D,), dtype=jnp.float32)
    w2 = 0.02 * jax.random.normal(kw2, (F, D), dtype=jnp.float32)
    b2 = 0.1 * jax.random.normal(kb2, (F,), dtype=jnp.float32)
    gamma = 1.0 + 0.2 * jax.random.normal(kg, (D,), dtype=jnp.float32)
    beta = 0.2 * jax.random.normal(kbt, (D,), dtype=jnp.float32)

    params = prepare_params(w1, b1, w2, b2, gamma, beta)
    out = reslayer_forward(x, params)
    out = jax.block_until_ready(out)

    ref = reslayer_reference(x, w1, b1, w2, b2, gamma, beta)

    assert out.shape == (B, F)
    # bf16 MXU operands (f32 accumulation) vs a pure-f32 reference.
    assert jnp.allclose(out, ref, atol=2e-2, rtol=2e-2), (
        float(jnp.max(jnp.abs(out - ref))))

    print("KERNEL_OK")
</pallas_src>

<mosaic_0001>
module attributes {stable_mosaic.version = 11 : i64} {
  func.func @_stats_kernel(%arg0: i32, %arg1: memref<256x128xf32, #tpu.memory_space<vmem>>, %arg2: memref<128x128xbf16, #tpu.memory_space<vmem>>, %arg3: memref<1x128xf32, #tpu.memory_space<vmem>>, %arg4: memref<1x128xf32, #tpu.memory_space<vmem>>, %arg5: memref<2x128xf32, #tpu.memory_space<vmem>>, %arg6: memref<1x128xf32, #tpu.memory_space<vmem>>, %arg7: memref<1x128xf32, #tpu.memory_space<vmem>>) attributes {dimension_semantics = [#tpu.dimension_semantics<arbitrary>], iteration_bounds = array<i64: 2>, scalar_prefetch = 0 : i64, scratch_operands = 2 : i64, tpu.core_type = #tpu.core_type<tc>, window_params = [{transform_indices = @transform_0, window_bounds = array<i64: 256, 128>}, {pipeline_mode = #tpu.pipeline_mode<synchronous>, transform_indices = @transform_1, window_bounds = array<i64: 128, 128>}, {pipeline_mode = #tpu.pipeline_mode<synchronous>, transform_indices = @transform_2, window_bounds = array<i64: 1, 128>}, {pipeline_mode = #tpu.pipeline_mode<synchronous>, transform_indices = @transform_3, window_bounds = array<i64: 1, 128>}, {pipeline_mode = #tpu.pipeline_mode<synchronous>, transform_indices = @transform_4, window_bounds = array<i64: 2, 128>}]} {
    %c0_i32 = arith.constant 0 : i32
    %0 = arith.cmpi eq, %arg0, %c0_i32 : i32
    %1 = arith.extui %0 : i1 to i32
    %c0_i32_0 = arith.constant 0 : i32
    %2 = arith.cmpi ne, %1, %c0_i32_0 : i32
    scf.if %2 {
      %cst_15 = arith.constant 0.000000e+00 : f32
      %21 = vector.broadcast %cst_15 : f32 to vector<1x128xf32>
      %c0_16 = arith.constant 0 : index
      %c0_17 = arith.constant 0 : index
      %22 = vector.load %arg6[%c0_16, %c0_17] : memref<1x128xf32, #tpu.memory_space<vmem>>, vector<1x128xf32>
      tpu.vector_store %arg6[%c0_16, %c0_17], %21 {strides = array<i32>} : memref<1x128xf32, #tpu.memory_space<vmem>>, vector<1x128xf32>,
      %cst_18 = arith.constant 0.000000e+00 : f32
      %23 = vector.broadcast %cst_18 : f32 to vector<1x128xf32>
      %c0_19 = arith.constant 0 : index
      %c0_20 = arith.constant 0 : index
      %24 = vector.load %arg7[%c0_19, %c0_20] : memref<1x128xf32, #tpu.memory_space<vmem>>, vector<1x128xf32>
      tpu.vector_store %arg7[%c0_19, %c0_20], %23 {strides = array<i32>} : memref<1x128xf32, #tpu.memory_space<vmem>>, vector<1x128xf32>,
    } else {
    }
    %c0 = arith.constant 0 : index
    %c0_1 = arith.constant 0 : index
    %3 = vector.load %arg1[%c0, %c0_1] : memref<256x128xf32, #tpu.memory_space<vmem>>, vector<256x128xf32>
    %4 = arith.truncf %3 : vector<256x128xf32> to vector<256x128xbf16>
    %c0_2 = arith.constant 0 : index
    %c0_3 = arith.constant 0 : index
    %5 = vector.load %arg2[%c0_2, %c0_3] : memref<128x128xbf16, #tpu.memory_space<vmem>>, vector<128x128xbf16>
    %cst = arith.constant dense<0.000000e+00> : vector<256x128xf32>
    %6 = tpu.matmul %4, %5, %cst {dimension_numbers = #tpu.dot_dimension_numbers<[1], [1], [0], [0], [0, 0, 1, 0], [], []>} : vector<256x128xbf16>, vector<128x128xbf16>, vector<256x128xf32> -> vector<256x128xf32>
    %c0_4 = arith.constant 0 : index
    %c0_5 = arith.constant 0 : index
    %7 = vector.load %arg6[%c0_4, %c0_5] : memref<1x128xf32, #tpu.memory_space<vmem>>, vector<1x128xf32>
    %cst_6 = arith.constant dense<0.000000e+00> : vector<128xf32>
    %8 = vector.multi_reduction <add>, %6, %cst_6 [0] : vector<256x128xf32> to vector<128xf32>
    %9 = vector.shape_cast %8 : vector<128xf32> to vector<1x128xf32>
    %10 = arith.addf %7, %9 : vector<1x128xf32>
    %c0_7 = arith.constant 0 : index
    %c0_8 = arith.constant 0 : index
    %11 = vector.load %arg6[%c0_7, %c0_8] : memref<1x128xf32, #tpu.memory_space<vmem>>, vector<1x128xf32>
    tpu.vector_store %arg6[%c0_7, %c0_8], %10 {strides = array<i32>} : memref<1x128xf32, #tpu.memory_space<vmem>>, vector<1x128xf32>,
    %c0_9 = arith.constant 0 : index
    %c0_10 = arith.constant 0 : index
    %12 = vector.load %arg7[%c0_9, %c0_10] : memref<1x128xf32, #tpu.memory_space<vmem>>, vector<1x128xf32>
    %13 = arith.mulf %6, %6 : vector<256x128xf32>
    %cst_11 = arith.constant dense<0.000000e+00> : vector<128xf32>
    %14 = vector.multi_reduction <add>, %13, %cst_11 [0] : vector<256x128xf32> to vector<128xf32>
    %15 = vector.shape_cast %14 : vector<128xf32> to vector<1x128xf32>
    %16 = arith.addf %12, %15 : vector<1x128xf32>
    %c0_12 = arith.constant 0 : index
    %c0_13 = arith.constant 0 : index
    %17 = vector.load %arg7[%c0_12, %c0_13] : memref<1x128xf32, #tpu.memory_space<vmem>>, vector<1x128xf32>
    tpu.vector_store %arg7[%c0_12, %c0_13], %16 {strides = array<i32>} : memref<1x128xf32, #tpu.memory_space<vmem>>, vector<1x128xf32>,
    %c1_i32 = arith.constant 1 : i32
    %18 = arith.cmpi eq, %arg0, %c1_i32 : i32
    %19 = arith.extui %18 : i1 to i32
    %c0_i32_14 = arith.constant 0 : i32
    %20 = arith.cmpi ne, %19, %c0_i32_14 : i32
    scf.if %20 {
      %c0_15 = arith.constant 0 : index
      %c0_16 = arith.constant 0 : index
      %21 = vector.load %arg6[%c0_15, %c0_16] : memref<1x128xf32, #tpu.memory_space<vmem>>, vector<1x128xf32>
      %cst_17 = arith.constant 0.001953125 : f32
      %22 = vector.broadcast %cst_17 : f32 to vector<1x128xf32>
      %23 = arith.mulf %21, %22 : vector<1x128xf32>
      %c0_18 = arith.constant 0 : index
      %c0_19 = arith.constant 0 : index
      %24 = vector.load %arg7[%c0_18, %c0_19] : memref<1x128xf32, #tpu.memory_space<vmem>>, vector<1x128xf32>
      %cst_20 = arith.constant 0.001953125 : f32
      %25 = vector.broadcast %cst_20 : f32 to vector<1x128xf32>
      %26 = arith.mulf %24, %25 : vector<1x128xf32>
      %27 = arith.mulf %23, %23 : vector<1x128xf32>
      %28 = arith.subf %26, %27 : vector<1x128xf32>
      %c0_21 = arith.constant 0 : index
      %c0_22 = arith.constant 0 : index
      %29 = vector.load %arg3[%c0_21, %c0_22] : memref<1x128xf32, #tpu.memory_space<vmem>>, vector<1x128xf32>
      %cst_23 = arith.constant 9.99999974E-6 : f32
      %30 = vector.broadcast %cst_23 : f32 to vector<1x128xf32>
      %31 = arith.addf %28, %30 : vector<1x128xf32>
      %32 = math.rsqrt %31 : vector<1x128xf32>
      %33 = arith.mulf %29, %32 : vector<1x128xf32>
      %c0_24 = arith.constant 0 : index
      %c0_25 = arith.constant 0 : index
      %34 = vector.load %arg4[%c0_24, %c0_25] : memref<1x128xf32, #tpu.memory_space<vmem>>, vector<1x128xf32>
      %35 = arith.mulf %23, %33 : vector<1x128xf32>
      %36 = arith.subf %34, %35 : vector<1x128xf32>
      %c0_26 = arith.constant 0 : index
      %c0_27 = arith.constant 0 : index
      %37 = vector.load %arg5[%c0_26, %c0_27] : memref<2x128xf32, #tpu.memory_space<vmem>>, vector<1x128xf32>
      tpu.vector_store %arg5[%c0_26, %c0_27], %33 {strides = array<i32>} : memref<2x128xf32, #tpu.memory_space<vmem>>, vector<1x128xf32>,
      %c1 = arith.constant 1 : index
      %c0_28 = arith.constant 0 : index
      %38 = vector.load %arg5[%c1, %c0_28] : memref<2x128xf32, #tpu.memory_space<vmem>>, vector<1x128xf32>
      tpu.vector_store %arg5[%c1, %c0_28], %36 {strides = array<i32>} : memref<2x128xf32, #tpu.memory_space<vmem>>, vector<1x128xf32>,
    } else {
    }
    return
  }
  func.func @transform_0(%arg0: i32) -> (i32, i32) {
    %c0_i32 = arith.constant 0 : i32
    %c0_i32_0 = arith.constant 0 : i32
    return %arg0, %c0_i32 : i32, i32
  }
  func.func @transform_1(%arg0: i32) -> (i32, i32) {
    %c0_i32 = arith.constant 0 : i32
    %c0_i32_0 = arith.constant 0 : i32
    %c0_i32_1 = arith.constant 0 : i32
    return %c0_i32, %c0_i32_0 : i32, i32
  }
  func.func @transform_2(%arg0: i32) -> (i32, i32) {
    %c0_i32 = arith.constant 0 : i32
    %c0_i32_0 = arith.constant 0 : i32
    %c0_i32_1 = arith.constant 0 : i32
    return %c0_i32, %c0_i32_0 : i32, i32
  }
  func.func @transform_3(%arg0: i32) -> (i32, i32) {
    %c0_i32 = arith.constant 0 : i32
    %c0_i32_0 = arith.constant 0 : i32
    %c0_i32_1 = arith.constant 0 : i32
    return %c0_i32, %c0_i32_0 : i32, i32
  }
  func.func @transform_4(%arg0: i32) -> (i32, i32) {
    %c0_i32 = arith.constant 0 : i32
    %c0_i32_0 = arith.constant 0 : i32
    %c0_i32_1 = arith.constant 0 : i32
    return %c0_i32, %c0_i32_0 : i32, i32
  }
}

</mosaic_0001>

<llo_original>
// kernel: tpu_custom_call.1
$region0: #{tpu_custom_call.1}
  #allocation0 [shape = 'u32[]', space=smem, size = 0x4, offset = 0x4, fixed_abs, tag = 'smem constant byte address 0x4 - core index']
  #allocation1 [shape = 'u32[144,128]{1,0:T(1,128)}', space=vmem, size = 0x12000, scoped, tag = 'internal scratch']
  #allocation2 [shape = 'f32[1,128]{1,0:T(1,128)}', space=vmem, size = 0x200, scoped, tag = 'scratch operand']
  #allocation3 [shape = 'f32[1,128]{1,0:T(1,128)}', space=vmem, size = 0x200, scoped, tag = 'scratch operand']
  %s0 = inlined_call_operand.hbm [shape: f32[512,128], index: 0, kind: input, shape index: {}]
  %s1 = inlined_call_operand.hbm [shape: bf16[128,128], index: 1, kind: input, shape index: {}]
  %s2 = inlined_call_operand.vmem [shape: f32[1,128], index: 2, kind: input, shape index: {}]
  %s3 = inlined_call_operand.vmem [shape: f32[1,128], index: 3, kind: input, shape index: {}]
  %s4 = inlined_call_operand.hbm [shape: f32[2,128], index: 4, kind: output, shape index: {}]
  %s5 = sld [smem:[#allocation0]]
  $region65: #{tpu_custom_call.1} parent=0
    _
  %s7 = ssub.s32 1, %s5
  %s8 = scalar_select 0, %s7, %s5
  $region1: #{tpu_custom_call.1} parent=0
    #allocation4 [shape = 'u8[262144]{0}', space=vmem, size = 0x40000, scoped, tag = 'input window, operand 0']
    #allocation5 [shape = 's32[2]{0}', space=sflag, size = 0x8, scoped, tag = 'scoped memory for tpu_custom_call.1']
    #allocation6 [shape = 's32[2]{0}', space=sflag, size = 0x8, scoped, tag = 'scoped memory for tpu_custom_call.1']
    #allocation7 [shape = 'u8[32768]{0}', space=vmem, size = 0x8000, scoped, tag = 'input window, operand 1, single buffered']
    #allocation8 [shape = 's32[1]{0}', space=sflag, size = 0x4, scoped, tag = 'scoped memory for tpu_custom_call.1']
    #allocation9 [shape = 'u8[1024]{0}', space=vmem, size = 0x400, scoped, tag = 'output window, operand 0, single buffered']
    %9 = vsyncpa [#allocation5], 0
    %s10 = scalar_lea.sflag [#allocation5], 1
    %11 = vsyncpa %s10, 0
    %12 = vsyncpa [#allocation8], 0
    %13 = vsyncpa [#allocation6], 0
    loop: start=0, step=1, limit=4
    $region2: #{tpu_custom_call.1} parent=1 // loop_pre_header
      _
    $region3: #{tpu_custom_call.1} parent=1 // loop_header
      %s15 = sphi 0, %s19
      %p16 = scmp.ge.s32.totalorder %s15, 4
      %s25 = sphi 0, %s27
      %s28 = sphi 0, %s25
      %s29 = sphi 0, %s28
      %s45 = sphi 0, %s29
      %s49 = sphi 0, %s49
      %s51 = sphi 0, %s49
      %s52 = sphi 0, %s51
      %s66 = sphi 0, %s52
      %s70 = sphi 0, %s70
      %s72 = sphi 0, %s70
      %s73 = sphi 0, %s72
      %s87 = sphi 0, %s73
      %s91 = sphi 0, %s91
      %s93 = sphi 0, %s91
      %s94 = sphi 0, %s93
      %s108 = sphi 0, %s94
      %s112 = sphi 0, %s112
      %s114 = sphi 0, %s112
      %s115 = sphi 0, %s114
      %s129 = sphi 0, %s115
    $region4: #{tpu_custom_call.1} parent=1 // loop_header_branch
      %18 = sbr.rel (%p16) target = $region8
    $region5: #{tpu_custom_call.1} parent=1 // loop_body
      %s20 = ssub.s32 %s15, 1
      %s21 = ssub.s32 %s15, 2
      %s22 = sadd.s32 %s15, 1
      %s23 = ssub.s32 %s15, %s22
      %p24 = scmp.eq.s32.totalorder %s23, 0
      %s26 = sadd.s32 %s25, 1
      %s27 = scalar_select %p24, %s25, %s26
      %p30 = pneg %p24
      %p31 = scmp.eq.s32.totalorder %s15, 1
      %p32 = por %p30, %p31
      %p33 = scmp.ne.s32.totalorder %s25, %s28
      %p34 = scmp.eq.s32.totalorder %s15, 0
      %p35 = por %p33, %p34
      %p36 = scmp.ne.s32.totalorder %s25, %s28
      %p37 = scmp.eq.s32.totalorder %s20, 1
      %p38 = por %p36, %p37
      %p39 = scmp.ne.s32.totalorder %s28, %s29
      %p40 = scmp.eq.s32.totalorder %s20, 0
      %p41 = por %p39, %p40
      %p42 = scmp.ne.s32.totalorder %s28, %s29
      %p43 = scmp.eq.s32.totalorder %s21, 1
      %p44 = por %p42, %p43
      %p46 = scmp.ne.s32.totalorder %s29, %s45
      %p47 = scmp.eq.s32.totalorder %s21, 0
      %p48 = por %p46, %p47
      %s50 = sadd.s32 %s49, 1
      %p53 = scmp.eq.s32.totalorder %s15, 1
      %p54 = scmp.ne.s32.totalorder %s49, %s51
      %p55 = scmp.eq.s32.totalorder %s15, 0
      %p56 = por %p54, %p55
      %p57 = scmp.ne.s32.totalorder %s49, %s51
      %p58 = scmp.eq.s32.totalorder %s20, 1
      %p59 = por %p57, %p58
      %p60 = scmp.ne.s32.totalorder %s51, %s52
      %p61 = scmp.eq.s32.totalorder %s20, 0
      %p62 = por %p60, %p61
      %p63 = scmp.ne.s32.totalorder %s51, %s52
      %p64 = scmp.eq.s32.totalorder %s21, 1
      %p65 = por %p63, %p64
      %p67 = scmp.ne.s32.totalorder %s52, %s66
      %p68 = scmp.eq.s32.totalorder %s21, 0
      %p69 = por %p67, %p68
      %s71 = sadd.s32 %s70, 1
      %p74 = scmp.eq.s32.totalorder %s15, 1
      %p75 = scmp.ne.s32.totalorder %s70, %s72
      %p76 = scmp.eq.s32.totalorder %s15, 0
      %p77 = por %p75, %p76
      %p78 = scmp.ne.s32.totalorder %s70, %s72
      %p79 = scmp.eq.s32.totalorder %s20, 1
      %p80 = por %p78, %p79
      %p81 = scmp.ne.s32.totalorder %s72, %s73
      %p82 = scmp.eq.s32.totalorder %s20, 0
      %p83 = por %p81, %p82
      %p84 = scmp.ne.s32.totalorder %s72, %s73
      %p85 = scmp.eq.s32.totalorder %s21, 1
      %p86 = por %p84, %p85
      %p88 = scmp.ne.s32.totalorder %s73, %s87
      %p89 = scmp.eq.s32.totalorder %s21, 0
      %p90 = por %p88, %p89
      %s92 = sadd.s32 %s91, 1
      %p95 = scmp.eq.s32.totalorder %s15, 1
      %p96 = scmp.ne.s32.totalorder %s91, %s93
      %p97 = scmp.eq.s32.totalorder %s15, 0
      %p98 = por %p96, %p97
      %p99 = scmp.ne.s32.totalorder %s91, %s93
      %p100 = scmp.eq.s32.totalorder %s20, 1
      %p101 = por %p99, %p100
      %p102 = scmp.ne.s32.totalorder %s93, %s94
      %p103 = scmp.eq.s32.totalorder %s20, 0
      %p104 = por %p102, %p103
      %p105 = scmp.ne.s32.totalorder %s93, %s94
      %p106 = scmp.eq.s32.totalorder %s21, 1
      %p107 = por %p105, %p106
      %p109 = scmp.ne.s32.totalorder %s94, %s108
      %p110 = scmp.eq.s32.totalorder %s21, 0
      %p111 = por %p109, %p110
      %s113 = sadd.s32 %s112, 1
      %p116 = scmp.eq.s32.totalorder %s15, 1
      %p117 = scmp.ne.s32.totalorder %s112, %s114
      %p118 = scmp.eq.s32.totalorder %s15, 0
      %p119 = por %p117, %p118
      %p120 = scmp.ne.s32.totalorder %s112, %s114
      %p121 = scmp.eq.s32.totalorder %s20, 1
      %p122 = por %p120, %p121
      %p123 = scmp.ne.s32.totalorder %s114, %s115
      %p124 = scmp.eq.s32.totalorder %s20, 0
      %p125 = por %p123, %p124
      %p126 = scmp.ne.s32.totalorder %s114, %s115
      %p127 = scmp.eq.s32.totalorder %s21, 1
      %p128 = por %p126, %p127
      %p130 = scmp.ne.s32.totalorder %s115, %s129
      %p131 = scmp.eq.s32.totalorder %s21, 0
      %p132 = por %p130, %p131
      %p133 = scmp.le.s32.totalorder 1, %s15
      %p134 = scmp.lt.s32.totalorder %s15, 3
      %p135 = pnand %p133, %p134
      %p136 = pneg %p135
      // Predicated region
      $region9: #{tpu_custom_call.1} parent=5 // pred_check
        _
      $region10: #{tpu_custom_call.1} parent=5 // pred_check_branch
        %138 = sbr.rel (%p135) target = $region12
      $region11: #{tpu_custom_call.1} parent=5 // pred_region
        %s139 = ssub.s32 %s15, 1
        // Predicated region
        $region13: #{tpu_custom_call.1} parent=11 // pred_check
          %p140 = pneg %p62
        $region14: #{tpu_custom_call.1} parent=11 // pred_check_branch
          %142 = sbr.rel (%p140) target = $region16
        $region15: #{tpu_custom_call.1} parent=11 // pred_region
          %s144 = ssub.s32 1024, 1024
          %145 = vsyncadd [#allocation8], %s144
          %s146 = sshll.u32 [#allocation7], 4
          %s147 = int_to_ptr.vmem [resolvable:$true] %s146
          %152 = dma.hbm_to_vmem [thread:$0]  %s1, 1024, %s147, [#allocation8], 64, 64, 4
        $region16: #{tpu_custom_call.1} parent=11 // pred_fallthru
          _
        // Predicated region
        $region17: #{tpu_custom_call.1} parent=11 // pred_check
          %p153 = pneg %p83
        $region18: #{tpu_custom_call.1} parent=11 // pred_check_branch
          %155 = sbr.rel (%p153) target = $region20
        $region19: #{tpu_custom_call.1} parent=11 // pred_region
          _
        $region20: #{tpu_custom_call.1} parent=11 // pred_fallthru
          _
        // Predicated region
        $region21: #{tpu_custom_call.1} parent=11 // pred_check
          %p156 = pneg %p104
        $region22: #{tpu_custom_call.1} parent=11 // pred_check_branch
          %158 = sbr.rel (%p156) target = $region24
        $region23: #{tpu_custom_call.1} parent=11 // pred_region
          _
        $region24: #{tpu_custom_call.1} parent=11 // pred_fallthru
          _
      $region12: #{tpu_custom_call.1} parent=5 // pred_fallthru
        _
      %p159 = scmp.lt.s32.totalorder %s15, 2
      // Predicated region
      $region25: #{tpu_custom_call.1} parent=5 // pred_check
        %p160 = pneg %p159
      $region26: #{tpu_custom_call.1} parent=5 // pred_check_branch
        %162 = sbr.rel (%p160) target = $region28
      $region27: #{tpu_custom_call.1} parent=5 // pred_region
        // Predicated region
        $region29: #{tpu_custom_call.1} parent=27 // pred_check
          %p163 = pneg %p35
        $region30: #{tpu_custom_call.1} parent=27 // pred_check_branch
          %165 = sbr.rel (%p163) target = $region32
        $region31: #{tpu_custom_call.1} parent=27 // pred_region
          %s166 = sand.u32 %s25, 1
          %s167 = scalar_lea.sflag [#allocation5], %s166
          %s168 = sand.u32 %s25, 1
          %s169 = smul.addr %s168, 256
          %s170 = scalar_lea.vmem [#allocation4], %s169
          %s171 = smul.u32 32, %s15
          %s173 = ssub.s32 4096, 4096
          %174 = vsyncadd %s167, %s173
          %s175 = smul.addr %s171, 128
          %s176 = scalar_lea.hbm %s0, %s175
          %s177 = sshll.u32 %s170, 4
          %s178 = int_to_ptr.vmem [resolvable:$true] %s177
          %183 = dma.hbm_to_vmem [thread:$0]  %s176, 4096, %s178, %s167, 128, 128, 8
        $region32: #{tpu_custom_call.1} parent=27 // pred_fallthru
          _
      $region28: #{tpu_custom_call.1} parent=5 // pred_fallthru
        _
      %p184 = scmp.le.s32.totalorder 1, %s15
      %p185 = scmp.lt.s32.totalorder %s15, 3
      %p186 = pnand %p184, %p185
      %p187 = pneg %p186
      // Predicated region
      $region33: #{tpu_custom_call.1} parent=5 // pred_check
        _
      $region34: #{tpu_custom_call.1} parent=5 // pred_check_branch
        %189 = sbr.rel (%p186) target = $region36
      $region35: #{tpu_custom_call.1} parent=5 // pred_region
        %s190 = ssub.s32 %s15, 1
        %s191 = sand.u32 %s28, 1
        %s192 = scalar_lea.sflag [#allocation5], %s191
        %s193 = sand.u32 %s28, 1
        %s194 = smul.addr %s193, 256
        %s195 = scalar_lea.vmem [#allocation4], %s194
        // Predicated region
        $region37: #{tpu_custom_call.1} parent=35 // pred_check
          %p196 = pneg %p41
        $region38: #{tpu_custom_call.1} parent=35 // pred_check_branch
          %198 = sbr.rel (%p196) target = $region40
        $region39: #{tpu_custom_call.1} parent=35 // pred_region
          %199 = dma.done %s192, 4096
        $region40: #{tpu_custom_call.1} parent=35 // pred_fallthru
          _
        // Predicated region
        $region41: #{tpu_custom_call.1} parent=35 // pred_check
          %p200 = pneg %p62
        $region42: #{tpu_custom_call.1} parent=35 // pred_check_branch
          %202 = sbr.rel (%p200) target = $region44
        $region43: #{tpu_custom_call.1} parent=35 // pred_region
          %203 = dma.done [#allocation8], 1024
        $region44: #{tpu_custom_call.1} parent=35 // pred_fallthru
          _
        %s204 = sand.u32 %s28, 1
        %s205 = scalar_lea.sflag [#allocation5], %s204
        %s206 = sand.u32 %s28, 1
        %s207 = smul.addr %s206, 256
        %s208 = scalar_lea.vmem [#allocation4], %s207
        %p209 = pneg %p41
        %p210 = pneg %p38
        %p211 = pneg %p62
        %p212 = pneg %p59
        %p213 = pneg %p83
        %p214 = pneg %p80
        %p215 = pneg %p104
        %p216 = pneg %p101
        %p217 = pneg %p125
        %p218 = pneg %p122
        %s219 = smul.u32 32, %s20
        %p221 = scmp.eq.s32.totalorder %s20, 0
        // Predicated region
        $region45: #{tpu_custom_call.1} parent=35 // pred_check
          %p222 = pneg %p221
        $region46: #{tpu_custom_call.1} parent=35 // pred_check_branch
          %224 = sbr.rel (%p222) target = $region48
        $region47: #{tpu_custom_call.1} parent=35 // pred_region
          %225 = vst [vmem:[#allocation2] sm:$0x1] 0.0
          %226 = vst [vmem:[#allocation3] sm:$0x1] 0.0
        $region48: #{tpu_custom_call.1} parent=35 // pred_fallthru
          _
        %v227 = vld [vmem:[%s195] sm:$0xff]
        %v228 = vld [vmem:[%s195 + $0x8] sm:$0xff]
        %v229 = vld [vmem:[%s195 + $0x10] sm:$0xff]
        %v230 = vld [vmem:[%s195 + $0x18] sm:$0xff]
        %v231 = vld [vmem:[%s195 + $0x20] sm:$0xff]
        %v232 = vld [vmem:[%s195 + $0x28] sm:$0xff]
        %v233 = vld [vmem:[%s195 + $0x30] sm:$0xff]
        %v234 = vld [vmem:[%s195 + $0x38] sm:$0xff]
        %v235 = vld [vmem:[%s195 + $0x40] sm:$0xff]
        %v236 = vld [vmem:[%s195 + $0x48] sm:$0xff]
        %v237 = vld [vmem:[%s195 + $0x50] sm:$0xff]
        %v238 = vld [vmem:[%s195 + $0x58] sm:$0xff]
        %v239 = vld [vmem:[%s195 + $0x60] sm:$0xff]
        %v240 = vld [vmem:[%s195 + $0x68] sm:$0xff]
        %v241 = vld [vmem:[%s195 + $0x70] sm:$0xff]
        %v242 = vld [vmem:[%s195 + $0x78] sm:$0xff]
        %v243 = vld [vmem:[%s195 + $0x80] sm:$0xff]
        %v244 = vld [vmem:[%s195 + $0x88] sm:$0xff]
        %v245 = vld [vmem:[%s195 + $0x90] sm:$0xff]
        %v246 = vld [vmem:[%s195 + $0x98] sm:$0xff]
        %v247 = vld [vmem:[%s195 + $0xa0] sm:$0xff]
        %v248 = vld [vmem:[%s195 + $0xa8] sm:$0xff]
        %v249 = vld [vmem:[%s195 + $0xb0] sm:$0xff]
        %v250 = vld [vmem:[%s195 + $0xb8] sm:$0xff]
        %v251 = vld [vmem:[%s195 + $0xc0] sm:$0xff]
        %v252 = vld [vmem:[%s195 + $0xc8] sm:$0xff]
        %v253 = vld [vmem:[%s195 + $0xd0] sm:$0xff]
        %v254 = vld [vmem:[%s195 + $0xd8] sm:$0xff]
        %v255 = vld [vmem:[%s195 + $0xe0] sm:$0xff]
        %v256 = vld [vmem:[%s195 + $0xe8] sm:$0xff]
        %v257 = vld [vmem:[%s195 + $0xf0] sm:$0xff]
        %v258 = vld [vmem:[%s195 + $0xf8] sm:$0xff]
        %v259 = vpack.c.bf16 %v228, %v227
        %v260 = vpack.c.bf16 %v230, %v229
        %v261 = vpack.c.bf16 %v232, %v231
        %v262 = vpack.c.bf16 %v234, %v233
        %v263 = vpack.c.bf16 %v236, %v235
        %v264 = vpack.c.bf16 %v238, %v237
        %v265 = vpack.c.bf16 %v240, %v239
        %v266 = vpack.c.bf16 %v242, %v241
        %v267 = vpack.c.bf16 %v244, %v243
        %v268 = vpack.c.bf16 %v246, %v245
        %v269 = vpack.c.bf16 %v248, %v247
        %v270 = vpack.c.bf16 %v250, %v249
        %v271 = vpack.c.bf16 %v252, %v251
        %v272 = vpack.c.bf16 %v254, %v253
        %v273 = vpack.c.bf16 %v256, %v255
        %v274 = vpack.c.bf16 %v258, %v257
        %v275 = vld [vmem:[#allocation7] sm:$0xf]
        %v276 = vld [vmem:[#allocation7 + $0x4] sm:$0xf]
        %v277 = vld [vmem:[#allocation7 + $0x8] sm:$0xf]
        %v278 = vld [vmem:[#allocation7 + $0xc] sm:$0xf]
        %v279 = vld [vmem:[#allocation7 + $0x10] sm:$0xf]
        %v280 = vld [vmem:[#allocation7 + $0x14] sm:$0xf]
        %v281 = vld [vmem:[#allocation7 + $0x18] sm:$0xf]
        %v282 = vld [vmem:[#allocation7 + $0x1c] sm:$0xf]
        %v283 = vld [vmem:[#allocation7 + $0x20] sm:$0xf]
        %v284 = vld [vmem:[#allocation7 + $0x24] sm:$0xf]
        %v285 = vld [vmem:[#allocation7 + $0x28] sm:$0xf]
        %v286 = vld [vmem:[#allocation7 + $0x2c] sm:$0xf]
        %v287 = vld [vmem:[#allocation7 + $0x30] sm:$0xf]
        %v288 = vld [vmem:[#allocation7 + $0x34] sm:$0xf]
        %v289 = vld [vmem:[#allocation7 + $0x38] sm:$0xf]
        %v290 = vld [vmem:[#allocation7 + $0x3c] sm:$0xf]
        %v307 = vunpack.c.l.b16 %v275
        %v308 = vunpack.c.l.b16 %v276
        %v309 = vunpack.c.l.b16 %v277
        %v310 = vunpack.c.l.b16 %v278
        %v311 = vunpack.c.l.b16 %v279
        %v312 = vunpack.c.l.b16 %v280
        %v313 = vunpack.c.l.b16 %v281
        %v314 = vunpack.c.l.b16 %v282
        %v315 = vunpack.c.l.b16 %v283
        %v316 = vunpack.c.l.b16 %v284
        %v317 = vunpack.c.l.b16 %v285
        %v318 = vunpack.c.l.b16 %v286
        %v319 = vunpack.c.l.b16 %v287
        %v320 = vunpack.c.l.b16 %v288
        %v321 = vunpack.c.l.b16 %v289
        %v322 = vunpack.c.l.b16 %v290
        %v323 = vpack.c.b16 %v308, %v307
        %v324 = vpack.c.b16 %v310, %v309
        %v325 = vpack.c.b16 %v312, %v311
        %v326 = vpack.c.b16 %v314, %v313
        %v327 = vpack.c.b16 %v316, %v315
        %v328 = vpack.c.b16 %v318, %v317
        %v329 = vpack.c.b16 %v320, %v319
        %v330 = vpack.c.b16 %v322, %v321
        %339 = vmatprep.subr.bf16.mxu0 0
        %340 = vmatpush1.bf16.xpose.msra.mxu0 %v330
        %341 = vmatprep.subr.bf16.mxu0 0
        %342 = vmatpush1.bf16.xpose.msra.mxu0 %v329
        %343 = vmatprep.subr.bf16.mxu0 0
        %344 = vmatpush1.bf16.xpose.msra.mxu0 %v328
        %345 = vmatprep.subr.bf16.mxu0 0
        %346 = vmatpush1.bf16.xpose.msra.mxu0 %v327
        %347 = vmatprep.subr.bf16.mxu0 0
        %348 = vmatpush1.bf16.xpose.msra.mxu0 %v326
        %349 = vmatprep.subr.bf16.mxu0 0
        %350 = vmatpush1.bf16.xpose.msra.mxu0 %v325
        %351 = vmatprep.subr.bf16.mxu0 0
        %352 = vmatpush1.bf16.xpose.msra.mxu0 %v324
        %353 = vmatprep.subr.bf16.mxu0 0
        %354 = vmatpush1.bf16.xpose.msra.mxu0 %v323
        %355 = vmatprep.subr.bf16.mxu0 0
        %356 = vmatpush2.bf16.xpose.msra.mxu0 0
        %357 = vmatprep.subr.bf16.mxu0 0
        %358 = vmatpush2.bf16.xpose.msra.mxu0 0
        %359 = vmatprep.subr.bf16.mxu0 0
        %360 = vmatpush2.bf16.xpose.msra.mxu0 0
        %361 = vmatprep.subr.bf16.mxu0 0
        %362 = vmatpush2.bf16.xpose.msra.mxu0 0
        %363 = vmatprep.subr.bf16.mxu0 0
        %364 = vmatpush2.bf16.xpose.msra.mxu0 0
        %365 = vmatprep.subr.bf16.mxu0 0
        %366 = vmatpush2.bf16.xpose.msra.mxu0 0
        %367 = vmatprep.subr.bf16.mxu0 0
        %368 = vmatpush2.bf16.xpose.msra.mxu0 0
        %369 = vmatprep.subr.bf16.mxu0 0
        %370 = vmatpush2.bf16.xpose.msra.mxu0 0
        %371 = vmatprep.mubr.bf16.mxu0 0
        %372 = vmatmul.mubr.bf16.gmra.mxu0 %v259
        %v373 = vpop.f32.mrf.mxu0
        %v374 = vadd.f32 0.0, %v373
        %v375 = vpop.f32.mrf.mxu0
        %v376 = vpop.f32.mrf.mxu0
        %v377 = vadd.f32 0.0, %v376
        %v378 = vpop.f32.mrf.mxu0
        %379 = vmatprep.mubr.bf16.mxu0 0
        %380 = vmatmul.mubr.bf16.gmra.mxu0 %v260
        %v381 = vpop.f32.mrf.mxu0
        %v382 = vadd.f32 0.0, %v381
        %v383 = vpop.f32.mrf.mxu0
        %v384 = vpop.f32.mrf.mxu0
        %v385 = vadd.f32 0.0, %v384
        %v386 = vpop.f32.mrf.mxu0
        %387 = vmatprep.mubr.bf16.mxu0 0
        %388 = vmatmul.mubr.bf16.gmra.mxu0 %v261
        %v389 = vpop.f32.mrf.mxu0
        %v390 = vadd.f32 0.0, %v389
        %v391 = vpop.f32.mrf.mxu0
        %v392 = vpop.f32.mrf.mxu0
        %v393 = vadd.f32 0.0, %v392
        %v394 = vpop.f32.mrf.mxu0
        %395 = vmatprep.mubr.bf16.mxu0 0
        %396 = vmatmul.mubr.bf16.gmra.mxu0 %v262
        %v397 = vpop.f32.mrf.mxu0
        %v398 = vadd.f32 0.0, %v397
        %v399 = vpop.f32.mrf.mxu0
        %v400 = vpop.f32.mrf.mxu0
        %v401 = vadd.f32 0.0, %v400
        %v402 = vpop.f32.mrf.mxu0
        %403 = vmatprep.mubr.bf16.mxu0 0
        %404 = vmatmul.mubr.bf16.gmra.mxu0 %v263
        %v405 = vpop.f32.mrf.mxu0
        %v406 = vadd.f32 0.0, %v405
        %v407 = vpop.f32.mrf.mxu0
        %v408 = vpop.f32.mrf.mxu0
        %v409 = vadd.f32 0.0, %v408
        %v410 = vpop.f32.mrf.mxu0
        %411 = vmatprep.mubr.bf16.mxu0 0
        %412 = vmatmul.mubr.bf16.gmra.mxu0 %v264
        %v413 = vpop.f32.mrf.mxu0
        %v414 = vadd.f32 0.0, %v413
        %v415 = vpop.f32.mrf.mxu0
        %v416 = vpop.f32.mrf.mxu0
        %v417 = vadd.f32 0.0, %v416
        %v418 = vpop.f32.mrf.mxu0
        %419 = vmatprep.mubr.bf16.mxu0 0
        %420 = vmatmul.mubr.bf16.gmra.mxu0 %v265
        %v421 = vpop.f32.mrf.mxu0
        %v422 = vadd.f32 0.0, %v421
        %v423 = vpop.f32.mrf.mxu0
        %v424 = vpop.f32.mrf.mxu0
        %v425 = vadd.f32 0.0, %v424
        %v426 = vpop.f32.mrf.mxu0
        %427 = vmatprep.mubr.bf16.mxu0 0
        %428 = vmatmul.mubr.bf16.gmra.mxu0 %v266
        %v429 = vpop.f32.mrf.mxu0
        %v430 = vadd.f32 0.0, %v429
        %v431 = vpop.f32.mrf.mxu0
        %v432 = vpop.f32.mrf.mxu0
        %v433 = vadd.f32 0.0, %v432
        %v434 = vpop.f32.mrf.mxu0
        %435 = vmatprep.mubr.bf16.mxu0 0
        %436 = vmatmul.mubr.bf16.gmra.mxu0 %v267
        %v437 = vpop.f32.mrf.mxu0
        %v438 = vadd.f32 0.0, %v437
        %v439 = vpop.f32.mrf.mxu0
        %v440 = vpop.f32.mrf.mxu0
        %v441 = vadd.f32 0.0, %v440
        %v442 = vpop.f32.mrf.mxu0
        %443 = vmatprep.mubr.bf16.mxu0 0
        %444 = vmatmul.mubr.bf16.gmra.mxu0 %v268
        %v445 = vpop.f32.mrf.mxu0
        %v446 = vadd.f32 0.0, %v445
        %v447 = vpop.f32.mrf.mxu0
        %v448 = vpop.f32.mrf.mxu0
        %v449 = vadd.f32 0.0, %v448
        %v450 = vpop.f32.mrf.mxu0
        %451 = vmatprep.mubr.bf16.mxu0 0
        %452 = vmatmul.mubr.bf16.gmra.mxu0 %v269
        %v453 = vpop.f32.mrf.mxu0
        %v454 = vadd.f32 0.0, %v453
        %v455 = vpop.f32.mrf.mxu0
        %v456 = vpop.f32.mrf.mxu0
        %v457 = vadd.f32 0.0, %v456
        %v458 = vpop.f32.mrf.mxu0
        %459 = vmatprep.mubr.bf16.mxu0 0
        %460 = vmatmul.mubr.bf16.gmra.mxu0 %v270
        %v461 = vpop.f32.mrf.mxu0
        %v462 = vadd.f32 0.0, %v461
        %v463 = vpop.f32.mrf.mxu0
        %v464 = vpop.f32.mrf.mxu0
        %v465 = vadd.f32 0.0, %v464
        %v466 = vpop.f32.mrf.mxu0
        %467 = vmatprep.mubr.bf16.mxu0 0
        %468 = vmatmul.mubr.bf16.gmra.mxu0 %v271
        %v469 = vpop.f32.mrf.mxu0
        %v470 = vadd.f32 0.0, %v469
        %v471 = vpop.f32.mrf.mxu0
        %v472 = vpop.f32.mrf.mxu0
        %v473 = vadd.f32 0.0, %v472
        %v474 = vpop.f32.mrf.mxu0
        %475 = vmatprep.mubr.bf16.mxu0 0
        %476 = vmatmul.mubr.bf16.gmra.mxu0 %v272
        %v477 = vpop.f32.mrf.mxu0
        %v478 = vadd.f32 0.0, %v477
        %v479 = vpop.f32.mrf.mxu0
        %v480 = vpop.f32.mrf.mxu0
        %v481 = vadd.f32 0.0, %v480
        %v482 = vpop.f32.mrf.mxu0
        %483 = vmatprep.mubr.bf16.mxu0 0
        %484 = vmatmul.mubr.bf16.gmra.mxu0 %v273
        %v485 = vpop.f32.mrf.mxu0
        %v486 = vadd.f32 0.0, %v485
        %v487 = vpop.f32.mrf.mxu0
        %v488 = vpop.f32.mrf.mxu0
        %v489 = vadd.f32 0.0, %v488
        %v490 = vpop.f32.mrf.mxu0
        %491 = vmatprep.mubr.bf16.mxu0 0
        %492 = vmatmul.mubr.bf16.gmra.mxu0 %v274
        %v493 = vpop.f32.mrf.mxu0
        %v494 = vadd.f32 0.0, %v493
        %v495 = vpop.f32.mrf.mxu0
        %v496 = vpop.f32.mrf.mxu0
        %v497 = vadd.f32 0.0, %v496
        %v498 = vpop.f32.mrf.mxu0
        %499 = vdwg.mxu0
        %v500 = vld [vmem:[#allocation2] sm:$0x1]
        %v501 = vadd.f32 %v374, %v377
        %v502 = vadd.f32 %v501, %v382
        %v503 = vadd.f32 %v502, %v385
        %v504 = vadd.f32 %v503, %v390
        %v505 = vadd.f32 %v504, %v393
        %v506 = vadd.f32 %v505, %v398
        %v507 = vadd.f32 %v506, %v401
        %v508 = vadd.f32 %v507, %v406
        %v509 = vadd.f32 %v508, %v409
        %v510 = vadd.f32 %v509, %v414
        %v511 = vadd.f32 %v510, %v417
        %v512 = vadd.f32 %v511, %v422
        %v513 = vadd.f32 %v512, %v425
        %v514 = vadd.f32 %v513, %v430
        %v515 = vadd.f32 %v514, %v433
        %v516 = vadd.f32 %v515, %v438
        %v517 = vadd.f32 %v516, %v441
        %v518 = vadd.f32 %v517, %v446
        %v519 = vadd.f32 %v518, %v449
        %v520 = vadd.f32 %v519, %v454
        %v521 = vadd.f32 %v520, %v457
        %v522 = vadd.f32 %v521, %v462
        %v523 = vadd.f32 %v522, %v465
        %v524 = vadd.f32 %v523, %v470
        %v525 = vadd.f32 %v524, %v473
        %v526 = vadd.f32 %v525, %v478
        %v527 = vadd.f32 %v526, %v481
        %v528 = vadd.f32 %v527, %v486
        %v529 = vadd.f32 %v528, %v489
        %v530 = vadd.f32 %v529, %v494
        %v531 = vadd.f32 %v530, %v497
        %v532 = vrot.slane %v531, 4
        %v533 = vadd.f32 %v531, %v532
        %v534 = vrot.slane %v533, 2
        %v535 = vadd.f32 %v533, %v534
        %v536 = vrot.slane %v535, 1
        %v537 = vadd.f32 %v535, %v536
        %v538 = vadd.f32 %v500, %v537
        %539 = vst [vmem:[#allocation2] sm:$0x1] %v538
        %v540 = vld [vmem:[#allocation3] sm:$0x1]
        %v541 = vmul.f32 %v374, %v374
        %v542 = vmul.f32 %v377, %v377
        %v543 = vmul.f32 %v382, %v382
        %v544 = vmul.f32 %v385, %v385
        %v545 = vmul.f32 %v390, %v390
        %v546 = vmul.f32 %v393, %v393
        %v547 = vmul.f32 %v398, %v398
        %v548 = vmul.f32 %v401, %v401
        %v549 = vmul.f32 %v406, %v406
        %v550 = vmul.f32 %v409, %v409
        %v551 = vmul.f32 %v414, %v414
        %v552 = vmul.f32 %v417, %v417
        %v553 = vmul.f32 %v422, %v422
        %v554 = vmul.f32 %v425, %v425
        %v555 = vmul.f32 %v430, %v430
        %v556 = vmul.f32 %v433, %v433
        %v557 = vmul.f32 %v438, %v438
        %v558 = vmul.f32 %v441, %v441
        %v559 = vmul.f32 %v446, %v446
        %v560 = vmul.f32 %v449, %v449
        %v561 = vmul.f32 %v454, %v454
        %v562 = vmul.f32 %v457, %v457
        %v563 = vmul.f32 %v462, %v462
        %v564 = vmul.f32 %v465, %v465
        %v565 = vmul.f32 %v470, %v470
        %v566 = vmul.f32 %v473, %v473
        %v567 = vmul.f32 %v478, %v478
        %v568 = vmul.f32 %v481, %v481
        %v569 = vmul.f32 %v486, %v486
        %v570 = vmul.f32 %v489, %v489
        %v571 = vmul.f32 %v494, %v494
        %v572 = vmul.f32 %v497, %v497
        %v573 = vadd.f32 %v541, %v542
        %v574 = vadd.f32 %v573, %v543
        %v575 = vadd.f32 %v574, %v544
        %v576 = vadd.f32 %v575, %v545
        %v577 = vadd.f32 %v576, %v546
        %v578 = vadd.f32 %v577, %v547
        %v579 = vadd.f32 %v578, %v548
        %v580 = vadd.f32 %v579, %v549
        %v581 = vadd.f32 %v580, %v550
        %v582 = vadd.f32 %v581, %v551
        %v583 = vadd.f32 %v582, %v552
        %v584 = vadd.f32 %v583, %v553
        %v585 = vadd.f32 %v584, %v554
        %v586 = vadd.f32 %v585, %v555
        %v587 = vadd.f32 %v586, %v556
        %v588 = vadd.f32 %v587, %v557
        %v589 = vadd.f32 %v588, %v558
        %v590 = vadd.f32 %v589, %v559
        %v591 = vadd.f32 %v590, %v560
        %v592 = vadd.f32 %v591, %v561
        %v593 = vadd.f32 %v592, %v562
        %v594 = vadd.f32 %v593, %v563
        %v595 = vadd.f32 %v594, %v564
        %v596 = vadd.f32 %v595, %v565
        %v597 = vadd.f32 %v596, %v566
        %v598 = vadd.f32 %v597, %v567
        %v599 = vadd.f32 %v598, %v568
        %v600 = vadd.f32 %v599, %v569
        %v601 = vadd.f32 %v600, %v570
        %v602 = vadd.f32 %v601, %v571
        %v603 = vadd.f32 %v602, %v572
        %v604 = vrot.slane %v603, 4
        %v605 = vadd.f32 %v603, %v604
        %v606 = vrot.slane %v605, 2
        %v607 = vadd.f32 %v605, %v606
        %v608 = vrot.slane %v607, 1
        %v609 = vadd.f32 %v607, %v608
        %v610 = vadd.f32 %v540, %v609
        %611 = vst [vmem:[#allocation3] sm:$0x1] %v610
        %p612 = scmp.eq.s32.totalorder %s20, 1
        // Predicated region
        $region49: #{tpu_custom_call.1} parent=35 // pred_check
          %p613 = pneg %p612
        $region50: #{tpu_custom_call.1} parent=35 // pred_check_branch
          %615 = sbr.rel (%p613) target = $region52
        $region51: #{tpu_custom_call.1} parent=35 // pred_region
          %v616 = vld [vmem:[#allocation2] sm:$0x1]
          %v617 = vmul.f32 %v616, 0.001953125
          %v618 = vld [vmem:[#allocation3] sm:$0x1]
          %v619 = vmul.f32 %v618, 0.001953125
          %v620 = vmul.f32 %v617, %v617
          %v621 = vsub.f32 %v619, %v620
          %v622 = vld [vmem:[%s2] sm:$0x1]
          %v623 = vadd.f32 %v621, 1e-05
          %v624 = vrsqrt.pop %v623
          %v625 = vmul.f32 %v622, %v624
          %v626 = vld [vmem:[%s3] sm:$0x1]
          %v627 = vmul.f32 %v617, %v625
          %v628 = vsub.f32 %v626, %v627
          %629 = vst [vmem:[#allocation9] sm:$0x1] %v625
          %630 = vst [vmem:[#allocation9 + $0x1] sm:$0x1] %v628
        $region52: #{tpu_custom_call.1} parent=35 // pred_fallthru
          _
        // Predicated region
        $region53: #{tpu_custom_call.1} parent=35 // pred_check
          %p631 = pneg %p122
        $region54: #{tpu_custom_call.1} parent=35 // pred_check_branch
          %633 = sbr.rel (%p631) target = $region56
        $region55: #{tpu_custom_call.1} parent=35 // pred_region
          %s635 = ssub.s32 32, 32
          %636 = vsyncadd [#allocation6], %s635
          %s638 = sshll.u32 [#allocation9], 4
          %s639 = int_to_ptr.vmem [resolvable:$true] %s638
          %641 = dma.vmem_to_hbm [thread:$0]  %s639, 32, %s4, [#allocation6]
        $region56: #{tpu_custom_call.1} parent=35 // pred_fallthru
          _
        // Predicated region
        $region57: #{tpu_custom_call.1} parent=35 // pred_check
          %p642 = pneg %p122
        $region58: #{tpu_custom_call.1} parent=35 // pred_check_branch
          %644 = sbr.rel (%p642) target = $region60
        $region59: #{tpu_custom_call.1} parent=35 // pred_region
          %645 = dma.done [#allocation6], 32
        $region60: #{tpu_custom_call.1} parent=35 // pred_fallthru
          _
      $region36: #{tpu_custom_call.1} parent=5 // pred_fallthru
        _
      %p646 = scmp.le.s32.totalorder 2, %s15
      // Predicated region
      $region61: #{tpu_custom_call.1} parent=5 // pred_check
        %p647 = pneg %p646
      $region62: #{tpu_custom_call.1} parent=5 // pred_check_branch
        %649 = sbr.rel (%p647) target = $region64
      $region63: #{tpu_custom_call.1} parent=5 // pred_region
        %s650 = ssub.s32 %s15, 2
      $region64: #{tpu_custom_call.1} parent=5 // pred_fallthru
        _
    $region6: #{tpu_custom_call.1} parent=1 // loop_footer
      %s19 = sadd.s32 1, %s15
    $region7: #{tpu_custom_call.1} parent=1 // loop_footer_branch
      %14 = sbr.rel target = $region3
    $region8: #{tpu_custom_call.1} parent=1 // loop_exit
      _
    %651 = vsyncpa [#allocation5], 1
    %s652 = scalar_lea.sflag [#allocation5], 1
    %653 = vsyncpa %s652, 1
    %654 = vsyncpa [#allocation8], 1
    %655 = vsyncpa [#allocation6], 1
    %s656 = scalar_lea.sflag [#allocation6], 1
    %657 = vsyncpa %s656, 1

</llo_original>
